<compile_context>
chip_gen: v7x
topology: tpu7x:2x2x1
jax: 0.10.0
libtpu: 0.0.40
codegen_flags: <defaults>
</compile_context>

<pallas_src>
import functools

import jax
import jax.numpy as jnp
from jax.experimental import pallas as pl
from jax.experimental.pallas import tpu as pltpu


# -----------------------------------------------------------------------------
# tiling helpers
# -----------------------------------------------------------------------------
def _pick_tile(dim, candidates=(256, 128)):
    """Largest MXU-friendly tile that divides `dim`, else the full dim (legal block)."""
    for t in candidates:
        if dim >= t and dim % t == 0:
            return t
    return dim


def _pick_k_tile(k):
    """Reduction tile: single block for small K, else a 128-multiple divisor."""
    if k <= 1024:
        return k
    for t in (512, 384, 256, 128):
        if k % t == 0:
            return t
    return None  # caller pads K


def _pick_row_band(h, w, target_rows=256):
    """Output-image rows per grid step for the direct 3x3 conv kernel."""
    mb = 1
    for cand in range(1, h + 1):
        if h % cand == 0 and cand * w <= target_rows:
            mb = cand
    return mb


# -----------------------------------------------------------------------------
# Pallas kernels
# -----------------------------------------------------------------------------
def _matmul_kernel(*refs, relu, has_residual):
    """o = act( a @ b + bias [+ residual] ); bf16 MXU inputs, f32 accumulator,
    K-tiled reduction on grid axis 2."""
    if has_residual:
        a_ref, b_ref, bias_ref, res_ref, o_ref, acc_ref = refs
    else:
        a_ref, b_ref, bias_ref, o_ref, acc_ref = refs
        res_ref = None
    k = pl.program_id(2)

    @pl.when(k == 0)
    def _():
        acc_ref[...] = jnp.zeros_like(acc_ref)

    acc_ref[...] += jnp.dot(a_ref[...].astype(jnp.bfloat16),
                            b_ref[...].astype(jnp.bfloat16),
                            preferred_element_type=jnp.float32)

    @pl.when(k == pl.num_programs(2) - 1)
    def _():
        out = acc_ref[...] + bias_ref[...]
        if has_residual:
            out = out + res_ref[...].astype(jnp.float32)
        if relu:
            out = jnp.maximum(out, 0.0)
        o_ref[...] = out.astype(o_ref.dtype)


def _conv3x3_s1_kernel(x_ref, w_ref, b_ref, o_ref, *, mb, relu):
    """Direct stride-1 3x3 conv: padded input resident in VMEM, the 9 taps are
    accumulated in-kernel (no materialized im2col)."""
    ni = pl.program_id(0)          # image index
    ri = pl.program_id(1)          # output-row band index
    _, hp, wp, cin = x_ref.shape
    w = wp - 2
    cout = o_ref.shape[-1]
    r0 = ri * mb

    acc = jnp.zeros((mb * w, cout), jnp.float32)
    for t in range(9):             # static tap loop -> static slices
        di, dj = t // 3, t % 3
        win = x_ref[ni, pl.ds(r0 + di, mb), pl.ds(dj, w), :]      # (mb, w, cin)
        a = win.reshape(mb * w, cin).astype(jnp.bfloat16)
        wt = w_ref[pl.ds(t * cin, cin), :].astype(jnp.bfloat16)   # (cin, cout)
        acc = acc + jnp.dot(a, wt, preferred_element_type=jnp.float32)

    out = acc + b_ref[...]
    if relu:
        out = jnp.maximum(out, 0.0)
    o_ref[...] = out.astype(o_ref.dtype)


def _avgpool_kernel(x_ref, o_ref):
    # x: (N, H*W, tc) channel tile -> o: (N, tc), global spatial mean.
    o_ref[...] = jnp.mean(x_ref[...].astype(jnp.float32), axis=1)


# -----------------------------------------------------------------------------
# Pallas wrappers
# -----------------------------------------------------------------------------
def matmul_bias_act(a, b, bias, *, relu, residual=None,
                    out_dtype=jnp.bfloat16, use_pallas=True):
    """(M,K)@(K,N) fused with bias, optional residual add, optional ReLU."""
    M, K = a.shape
    _, N = b.shape

    if not use_pallas:  # pure-jnp reference path (same bf16/f32 math as the kernel)
        out = jnp.dot(a.astype(jnp.bfloat16), b.astype(jnp.bfloat16),
                      preferred_element_type=jnp.float32) + bias[None, :]
        if residual is not None:
            out = out + residual.astype(jnp.float32)
        if relu:
            out = jnp.maximum(out, 0.0)
        return out.astype(out_dtype)

    tm = _pick_tile(M)
    tn = _pick_tile(N)
    tk = _pick_k_tile(K)
    if tk is None:  # pad K (zero contribution); never triggers at these shapes
        kp = (K + 511) // 512 * 512
        a = jnp.pad(a, ((0, 0), (0, kp - K)))
        b = jnp.pad(b, ((0, kp - K), (0, 0)))
        K, tk = kp, 512

    bias2 = bias.reshape(1, N).astype(jnp.float32)
    grid = (M // tm, N // tn, K // tk)

    in_specs = [
        pl.BlockSpec((tm, tk), lambda i, j, k: (i, k)),
        pl.BlockSpec((tk, tn), lambda i, j, k: (k, j)),
        pl.BlockSpec((1, tn), lambda i, j, k: (0, j)),
    ]
    inputs = [a, b, bias2]
    has_residual = residual is not None
    if has_residual:
        in_specs.append(pl.BlockSpec((tm, tn), lambda i, j, k: (i, j)))
        inputs.append(residual)

    return pl.pallas_call(
        functools.partial(_matmul_kernel, relu=relu, has_residual=has_residual),
        out_shape=jax.ShapeDtypeStruct((M, N), out_dtype),
        grid_spec=pltpu.PrefetchScalarGridSpec(
            num_scalar_prefetch=0,
            grid=grid,
            in_specs=in_specs,
            out_specs=pl.BlockSpec((tm, tn), lambda i, j, k: (i, j)),
            scratch_shapes=[pltpu.VMEM((tm, tn), jnp.float32)],
        ),
        compiler_params=pltpu.CompilerParams(
            dimension_semantics=("parallel", "parallel", "arbitrary")),
    )(*inputs)


def _conv3x3_s1_pallas(x, w_hwio, bias, *, relu, mb):
    """Direct stride-1, pad-1, 3x3 conv via the tap-accumulating kernel."""
    n, h, wd, cin = x.shape
    kh, kw, _, cout = w_hwio.shape
    hp, wp = h + 2, wd + 2
    xp = jnp.pad(x, ((0, 0), (1, 1), (1, 1), (0, 0)))
    w2 = w_hwio.reshape(kh * kw * cin, cout)
    b2 = bias.reshape(1, cout).astype(jnp.float32)
    bands = h // mb

    return pl.pallas_call(
        functools.partial(_conv3x3_s1_kernel, mb=mb, relu=relu),
        out_shape=jax.ShapeDtypeStruct((n * h * wd, cout), x.dtype),
        grid_spec=pltpu.PrefetchScalarGridSpec(
            num_scalar_prefetch=0,
            grid=(n, bands),
            in_specs=[
                # whole padded input / weights / bias stay resident in VMEM
                pl.BlockSpec((n, hp, wp, cin), lambda ni, ri: (0, 0, 0, 0)),
                pl.BlockSpec((kh * kw * cin, cout), lambda ni, ri: (0, 0)),
                pl.BlockSpec((1, cout), lambda ni, ri: (0, 0)),
            ],
            out_specs=pl.BlockSpec((mb * wd, cout),
                                   lambda ni, ri: (ni * bands + ri, 0)),
        ),
        compiler_params=pltpu.CompilerParams(
            dimension_semantics=("parallel", "parallel")),
    )(xp, w2, b2)


def global_avg_pool(x, use_pallas=True):
    """AdaptiveAvgPool2d((1,1)) + flatten: (N,H,W,C) -> (N,C) f32, channel-tiled."""
    n, h, w, c = x.shape
    if not use_pallas:
        return jnp.mean(x.astype(jnp.float32), axis=(1, 2))
    x2 = x.reshape(n, h * w, c)
    tc = 512 if (c % 512 == 0 and c >= 512) else (128 if c % 128 == 0 else c)
    return pl.pallas_call(
        _avgpool_kernel,
        out_shape=jax.ShapeDtypeStruct((n, c), jnp.float32),
        grid_spec=pltpu.PrefetchScalarGridSpec(
            num_scalar_prefetch=0,
            grid=(c // tc,),
            in_specs=[pl.BlockSpec((n, h * w, tc), lambda j: (0, 0, j))],
            out_specs=pl.BlockSpec((n, tc), lambda j: (0, j)),
        ),
        compiler_params=pltpu.CompilerParams(dimension_semantics=("parallel",)),
    )(x2)


def conv_bn_act(x, conv, *, relu, residual=None, use_pallas=True):
    """Conv2d (no bias) + folded BN affine (+ residual add) (+ ReLU)."""
    w = conv["w"]                  # HWIO, bf16, BN scale already folded in
    bias = conv["b"]               # f32, BN shift
    stride, padding = conv["stride"], conv["padding"]
    n, h, wd, cin = x.shape
    kh, kw, _, cout = w.shape
    ho = (h + 2 * padding - kh) // stride + 1
    wo = (wd + 2 * padding - kw) // stride + 1
    res2 = residual.reshape(n * ho * wo, cout) if residual is not None else None

    # 1x1 convs: plain fused matmul (no patch extraction needed).
    if kh == 1 and kw == 1:
        xs = x if stride == 1 else x[:, ::stride, ::stride, :]
        a = xs.reshape(n * ho * wo, cin)
        out = matmul_bias_act(a, w.reshape(cin, cout), bias, relu=relu,
                              residual=res2, use_pallas=use_pallas)
        return out.reshape(n, ho, wo, cout)

    # Stride-1 3x3 convs: direct conv kernel (no materialized im2col).
    if (use_pallas and residual is None and kh == 3 and kw == 3 and stride == 1
            and padding == 1 and ho == h and wo == wd and cin % 8 == 0):
        mb = _pick_row_band(h, wd)
        if (mb * wd) % 16 == 0:
            try:
                out = _conv3x3_s1_pallas(x, w, bias, relu=relu, mb=mb)
                return out.reshape(n, ho, wo, cout)
            except Exception:
                # Safety net: fall back to im2col+matmul if the direct-conv
                # lowering is unsupported on this toolchain.
                pass

    # im2col fallback (3-channel stem conv and stride-2 3x3 convs).
    # TODO(synk): stride-2 3x3 convs still materialize a (kh*kw)-expanded im2col.
    xp = (jnp.pad(x, ((0, 0), (padding, padding), (padding, padding), (0, 0)))
          if padding > 0 else x)
    patches = [xp[:, di:di + stride * ho:stride, dj:dj + stride * wo:stride, :]
               for di in range(kh) for dj in range(kw)]
    a = jnp.concatenate(patches, axis=-1).reshape(n * ho * wo, kh * kw * cin)
    out = matmul_bias_act(a, w.reshape(kh * kw * cin, cout), bias, relu=relu,
                          residual=res2, use_pallas=use_pallas)
    return out.reshape(n, ho, wo, cout)


# -----------------------------------------------------------------------------
# Parameter init (deterministic, synthetic) with BN scale folded into the weights
# -----------------------------------------------------------------------------
def _init_conv_bn(key, kh, kw, cin, cout, stride, padding, eps=1e-5):
    k1, k2, k3, k4 = jax.random.split(key, 4)
    fan_in = kh * kw * cin
    w = (jax.random.normal(k1, (kh, kw, cin, cout), jnp.float32)
         / jnp.sqrt(jnp.float32(fan_in)))
    gamma = 1.0 + 0.1 * jax.random.normal(k2, (cout,), jnp.float32)
    beta = 0.1 * jax.random.normal(k3, (cout,), jnp.float32)
    running_mean = 0.1 * jax.random.normal(k4, (cout,), jnp.float32)
    running_var = jnp.ones((cout,), jnp.float32)
    s = gamma / jnp.sqrt(running_var + eps)
    return {
        "w": (w * s[None, None, None, :]).astype(jnp.bfloat16),
        "b": (beta - running_mean * s).astype(jnp.float32),
        "stride": stride,
        "padding": padding,
    }


def make_resnet_params(key, layers=(1, 1, 1, 1), num_classes=10):
    params = {}
    key, k = jax.random.split(key)
    params["stem"] = _init_conv_bn(k, 3, 3, 3, 64, stride=1, padding=1)

    stage_cfg = [(64, 256, 1), (256, 512, 2), (512, 1024, 2), (1024, 2048, 2)]
    stages = []
    for (cin, cout, stride), nblocks in zip(stage_cfg, layers):
        blocks = []
        for bi in range(nblocks):
            b_in = cin if bi == 0 else cout
            b_stride = stride if bi == 0 else 1
            mid = cout // 4
            blk = {}
            key, k = jax.random.split(key)
            blk["c1"] = _init_conv_bn(k, 1, 1, b_in, mid, 1, 0)
            key, k = jax.random.split(key)
            blk["c2"] = _init_conv_bn(k, 3, 3, mid, mid, b_stride, 1)
            key, k = jax.random.split(key)
            blk["c3"] = _init_conv_bn(k, 1, 1, mid, cout, 1, 0)
            if b_stride != 1 or b_in != cout:
                key, k = jax.random.split(key)
                blk["cd"] = _init_conv_bn(k, 1, 1, b_in, cout, b_stride, 0)
            blocks.append(blk)
        stages.append(blocks)
    params["stages"] = stages

    key, k = jax.random.split(key)
    params["fc_w"] = (jax.random.normal(k, (2048, num_classes), jnp.float32)
                      / jnp.sqrt(jnp.float32(2048))).astype(jnp.bfloat16)
    key, k = jax.random.split(key)
    params["fc_b"] = 0.01 * jax.random.normal(k, (num_classes,), jnp.float32)
    return params


# -----------------------------------------------------------------------------
# Forward pass
# -----------------------------------------------------------------------------
def bottleneck_forward(blk, x, use_pallas=True):
    out = conv_bn_act(x, blk["c1"], relu=True, use_pallas=use_pallas)
    out = conv_bn_act(out, blk["c2"], relu=True, use_pallas=use_pallas)
    if "cd" in blk:
        residual = conv_bn_act(x, blk["cd"], relu=False, use_pallas=use_pallas)
    else:
        residual = x
    # Residual add + ReLU fused into the third conv's matmul epilogue.
    out = conv_bn_act(out, blk["c3"], relu=True, residual=residual,
                      use_pallas=use_pallas)
    return out


def resnet_forward(params, x_nchw, use_pallas=True):
    # NCHW (PyTorch input convention) -> NHWC bf16 for the TPU kernels.
    x = jnp.transpose(x_nchw, (0, 2, 3, 1)).astype(jnp.bfloat16)
    out = conv_bn_act(x, params["stem"], relu=True, use_pallas=use_pallas)
    for stage in params["stages"]:
        for blk in stage:
            out = bottleneck_forward(blk, out, use_pallas=use_pallas)
    pooled = global_avg_pool(out, use_pallas=use_pallas)           # (N, 2048) f32
    logits = matmul_bias_act(pooled, params["fc_w"], params["fc_b"],
                             relu=False, out_dtype=jnp.float32,
                             use_pallas=use_pallas)                # (N, 10)
    return logits


# -----------------------------------------------------------------------------
if __name__ == "__main__":
    key = jax.random.PRNGKey(0)
    k_in, k_par = jax.random.split(key)

    # CIFAR-style input (B=2, C=3, 32x32), small synthetic ResNet (1 block/stage).
    x = jax.random.normal(k_in, (2, 3, 32, 32), jnp.float32)
    params = make_resnet_params(k_par, layers=(1, 1, 1, 1), num_classes=10)

    out = jax.block_until_ready(resnet_forward(params, x, use_pallas=True))
    assert out.shape == (2, 10), out.shape

    # Cross-check the Pallas kernels against a like-for-like pure-jnp reference.
    ref = jax.block_until_ready(resnet_forward(params, x, use_pallas=False))
    rel_err = float(jnp.max(jnp.abs(out - ref)) / (jnp.max(jnp.abs(ref)) + 1e-6))
    assert rel_err < 5e-2, f"relative error too large: {rel_err}"

    print("KERNEL_OK")
</pallas_src>

<mosaic_0001>
module attributes {stable_mosaic.version = 11 : i64} {
  func.func @_matmul_kernel(%arg0: i32, %arg1: i32, %arg2: i32, %arg3: memref<256x27xbf16, #tpu.memory_space<vmem>>, %arg4: memref<27x64xbf16, #tpu.memory_space<vmem>>, %arg5: memref<1x64xf32, #tpu.memory_space<vmem>>, %arg6: memref<256x64xbf16, #tpu.memory_space<vmem>>, %arg7: memref<256x64xf32, #tpu.memory_space<vmem>>) attributes {dimension_semantics = [#tpu.dimension_semantics<parallel>, #tpu.dimension_semantics<parallel>, #tpu.dimension_semantics<arbitrary>], iteration_bounds = array<i64: 8, 1, 1>, scalar_prefetch = 0 : i64, scratch_operands = 1 : i64, tpu.core_type = #tpu.core_type<tc>, window_params = [{transform_indices = @transform_0, window_bounds = array<i64: 256, 27>}, {transform_indices = @transform_1, window_bounds = array<i64: 27, 64>}, {transform_indices = @transform_2, window_bounds = array<i64: 1, 64>}, {transform_indices = @transform_3, window_bounds = array<i64: 256, 64>}]} {
    %c0_i32 = arith.constant 0 : i32
    %0 = arith.cmpi eq, %arg2, %c0_i32 : i32
    %1 = arith.extui %0 : i1 to i32
    %c0_i32_0 = arith.constant 0 : i32
    %2 = arith.cmpi ne, %1, %c0_i32_0 : i32
    scf.if %2 {
      %cst_10 = arith.constant 0.000000e+00 : f32
      %12 = vector.broadcast %cst_10 : f32 to vector<256x64xf32>
      %c0_11 = arith.constant 0 : index
      %c0_12 = arith.constant 0 : index
      %13 = vector.load %arg7[%c0_11, %c0_12] : memref<256x64xf32, #tpu.memory_space<vmem>>, vector<256x64xf32>
      tpu.vector_store %arg7[%c0_11, %c0_12], %12 {strides = array<i32>} : memref<256x64xf32, #tpu.memory_space<vmem>>, vector<256x64xf32>,
    } else {
    }
    %c0 = arith.constant 0 : index
    %c0_1 = arith.constant 0 : index
    %3 = vector.load %arg7[%c0, %c0_1] : memref<256x64xf32, #tpu.memory_space<vmem>>, vector<256x64xf32>
    %c0_2 = arith.constant 0 : index
    %c0_3 = arith.constant 0 : index
    %4 = vector.load %arg3[%c0_2, %c0_3] : memref<256x27xbf16, #tpu.memory_space<vmem>>, vector<256x27xbf16>
    %c0_4 = arith.constant 0 : index
    %c0_5 = arith.constant 0 : index
    %5 = vector.load %arg4[%c0_4, %c0_5] : memref<27x64xbf16, #tpu.memory_space<vmem>>, vector<27x64xbf16>
    %cst = arith.constant dense<0.000000e+00> : vector<256x64xf32>
    %6 = tpu.matmul %4, %5, %cst {dimension_numbers = #tpu.dot_dimension_numbers<[1], [0], [0], [1], [0, 0, 1, 1], [], []>} : vector<256x27xbf16>, vector<27x64xbf16>, vector<256x64xf32> -> vector<256x64xf32>
    %7 = arith.addf %3, %6 : vector<256x64xf32>
    %c0_6 = arith.constant 0 : index
    %c0_7 = arith.constant 0 : index
    %8 = vector.load %arg7[%c0_6, %c0_7] : memref<256x64xf32, #tpu.memory_space<vmem>>, vector<256x64xf32>
    tpu.vector_store %arg7[%c0_6, %c0_7], %7 {strides = array<i32>} : memref<256x64xf32, #tpu.memory_space<vmem>>, vector<256x64xf32>,
    %c0_i32_8 = arith.constant 0 : i32
    %9 = arith.cmpi eq, %arg2, %c0_i32_8 : i32
    %10 = arith.extui %9 : i1 to i32
    %c0_i32_9 = arith.constant 0 : i32
    %11 = arith.cmpi ne, %10, %c0_i32_9 : i32
    scf.if %11 {
      %c0_10 = arith.constant 0 : index
      %c0_11 = arith.constant 0 : index
      %12 = vector.load %arg7[%c0_10, %c0_11] : memref<256x64xf32, #tpu.memory_space<vmem>>, vector<256x64xf32>
      %c0_12 = arith.constant 0 : index
      %c0_13 = arith.constant 0 : index
      %13 = vector.load %arg5[%c0_12, %c0_13] : memref<1x64xf32, #tpu.memory_space<vmem>>, vector<1x64xf32>
      %14 = vector.broadcast %13 : vector<1x64xf32> to vector<256x64xf32>
      %15 = arith.addf %12, %14 : vector<256x64xf32>
      %cst_14 = arith.constant 0.000000e+00 : f32
      %16 = vector.broadcast %cst_14 : f32 to vector<256x64xf32>
      %17 = arith.maximumf %15, %16 : vector<256x64xf32>
      %18 = arith.truncf %17 : vector<256x64xf32> to vector<256x64xbf16>
      %c0_15 = arith.constant 0 : index
      %c0_16 = arith.constant 0 : index
      %19 = vector.load %arg6[%c0_15, %c0_16] : memref<256x64xbf16, #tpu.memory_space<vmem>>, vector<256x64xbf16>
      tpu.vector_store %arg6[%c0_15, %c0_16], %18 {strides = array<i32>} : memref<256x64xbf16, #tpu.memory_space<vmem>>, vector<256x64xbf16>,
    } else {
    }
    return
  }
  func.func @transform_0(%arg0: i32, %arg1: i32, %arg2: i32) -> (i32, i32) {
    %c0_i32 = arith.constant 0 : i32
    return %arg0, %arg2 : i32, i32
  }
  func.func @transform_1(%arg0: i32, %arg1: i32, %arg2: i32) -> (i32, i32) {
    %c0_i32 = arith.constant 0 : i32
    return %arg2, %arg1 : i32, i32
  }
  func.func @transform_2(%arg0: i32, %arg1: i32, %arg2: i32) -> (i32, i32) {
    %c0_i32 = arith.constant 0 : i32
    %c0_i32_0 = arith.constant 0 : i32
    return %c0_i32, %arg1 : i32, i32
  }
  func.func @transform_3(%arg0: i32, %arg1: i32, %arg2: i32) -> (i32, i32) {
    %c0_i32 = arith.constant 0 : i32
    return %arg0, %arg1 : i32, i32
  }
}

</mosaic_0001>

<llo_original>
// kernel: tpu_custom_call.1
$region0: #{tpu_custom_call.1}
  #allocation0 [shape = 'u32[]', space=smem, size = 0x4, offset = 0x4, fixed_abs, tag = 'smem constant byte address 0x4 - core index']
  #allocation1 [shape = 'u32[144,128]{1,0:T(1,128)}', space=vmem, size = 0x12000, scoped, tag = 'internal scratch']
  #allocation2 [shape = 'f32[256,64]{1,0:T(8,128)}', space=vmem, size = 0x20000, scoped, tag = 'scratch operand']
  %s0 = inlined_call_operand.vmem [shape: bf16[2048,27], index: 0, kind: input, shape index: {}]
  %s1 = inlined_call_operand.vmem [shape: bf16[27,64], index: 1, kind: input, shape index: {}]
  %s2 = inlined_call_operand.vmem [shape: f32[1,64], index: 2, kind: input, shape index: {}]
  %s3 = inlined_call_operand.vmem [shape: bf16[2048,64], index: 3, kind: output, shape index: {}]
  %s4 = sld [smem:[#allocation0]]
  $region53: #{tpu_custom_call.1} parent=0
    _
  %s6 = ssub.s32 1, %s4
  %s7 = scalar_select 0, %s6, %s4
  loop: start=0, step=1, limit=10
  $region2: #{tpu_custom_call.1} parent=0 // loop_pre_header
    _
  $region3: #{tpu_custom_call.1} parent=0 // loop_header
    %s9 = sphi 0, %s13
    %p10 = scmp.ge.s32.totalorder %s9, 10
    %s16 = sphi 0, %s35
    %s17 = sphi 0, %s31
    %s18 = sphi 0, %s27
    %s19 = sphi 0, %s16
    %s20 = sphi 0, %s17
    %s21 = sphi 0, %s18
    %s22 = sphi 0, %s19
    %s23 = sphi 0, %s20
    %s24 = sphi 0, %s21
    %s40 = sphi 0, %s42
    %s43 = sphi 0, %s40
    %s44 = sphi 0, %s43
    %s60 = sphi 0, %s44
    %s68 = sphi 0, %s70
    %s71 = sphi 0, %s68
    %s72 = sphi 0, %s71
    %s88 = sphi 0, %s72
    %s94 = sphi 0, %s96
    %s97 = sphi 0, %s94
    %s98 = sphi 0, %s97
    %s114 = sphi 0, %s98
    %s122 = sphi 0, %s124
    %s125 = sphi 0, %s122
    %s126 = sphi 0, %s125
    %s142 = sphi 0, %s126
  $region4: #{tpu_custom_call.1} parent=0 // loop_header_branch
    %12 = sbr.rel (%p10) target = $region8
  $region5: #{tpu_custom_call.1} parent=0 // loop_body
    %s14 = ssub.s32 %s9, 1
    %s15 = ssub.s32 %s9, 2
    %s25 = sadd.s32 1, %s18
    %p26 = scmp.ge.s32.totalorder %s25, 1
    %s27 = scalar_select %p26, 0, %s25
    %s28 = sadd.s32 1, %s17
    %s29 = scalar_select %p26, %s28, %s17
    %p30 = scmp.ge.s32.totalorder %s29, 1
    %s31 = scalar_select %p30, 0, %s29
    %s32 = sadd.s32 1, %s16
    %s33 = scalar_select %p30, %s32, %s16
    %p34 = scmp.ge.s32.totalorder %s33, 8
    %s35 = scalar_select %p34, 0, %s33
    %s36 = ssub.s32 %s16, %s35
    %s37 = ssub.s32 %s18, %s27
    %s38 = sor.u32 %s36, %s37
    %p39 = scmp.eq.s32.totalorder %s38, 0
    %s41 = sadd.s32 %s40, 1
    %s42 = scalar_select %p39, %s40, %s41
    %p45 = pneg %p39
    %p46 = scmp.eq.s32.totalorder %s9, 7
    %p47 = por %p45, %p46
    %p48 = scmp.ne.s32.totalorder %s40, %s43
    %p49 = scmp.eq.s32.totalorder %s9, 0
    %p50 = por %p48, %p49
    %p51 = scmp.ne.s32.totalorder %s40, %s43
    %p52 = scmp.eq.s32.totalorder %s14, 7
    %p53 = por %p51, %p52
    %p54 = scmp.ne.s32.totalorder %s43, %s44
    %p55 = scmp.eq.s32.totalorder %s14, 0
    %p56 = por %p54, %p55
    %p57 = scmp.ne.s32.totalorder %s43, %s44
    %p58 = scmp.eq.s32.totalorder %s15, 7
    %p59 = por %p57, %p58
    %p61 = scmp.ne.s32.totalorder %s44, %s60
    %p62 = scmp.eq.s32.totalorder %s15, 0
    %p63 = por %p61, %p62
    %s64 = ssub.s32 %s18, %s27
    %s65 = ssub.s32 %s17, %s31
    %s66 = sor.u32 %s64, %s65
    %p67 = scmp.eq.s32.totalorder %s66, 0
    %s69 = sadd.s32 %s68, 1
    %s70 = scalar_select %p67, %s68, %s69
    %p73 = pneg %p67
    %p74 = scmp.eq.s32.totalorder %s9, 7
    %p75 = por %p73, %p74
    %p76 = scmp.ne.s32.totalorder %s68, %s71
    %p77 = scmp.eq.s32.totalorder %s9, 0
    %p78 = por %p76, %p77
    %p79 = scmp.ne.s32.totalorder %s68, %s71
    %p80 = scmp.eq.s32.totalorder %s14, 7
    %p81 = por %p79, %p80
    %p82 = scmp.ne.s32.totalorder %s71, %s72
    %p83 = scmp.eq.s32.totalorder %s14, 0
    %p84 = por %p82, %p83
    %p85 = scmp.ne.s32.totalorder %s71, %s72
    %p86 = scmp.eq.s32.totalorder %s15, 7
    %p87 = por %p85, %p86
    %p89 = scmp.ne.s32.totalorder %s72, %s88
    %p90 = scmp.eq.s32.totalorder %s15, 0
    %p91 = por %p89, %p90
    %s92 = ssub.s32 %s17, %s31
    %p93 = scmp.eq.s32.totalorder %s92, 0
    %s95 = sadd.s32 %s94, 1
    %s96 = scalar_select %p93, %s94, %s95
    %p99 = pneg %p93
    %p100 = scmp.eq.s32.totalorder %s9, 7
    %p101 = por %p99, %p100
    %p102 = scmp.ne.s32.totalorder %s94, %s97
    %p103 = scmp.eq.s32.totalorder %s9, 0
    %p104 = por %p102, %p103
    %p105 = scmp.ne.s32.totalorder %s94, %s97
    %p106 = scmp.eq.s32.totalorder %s14, 7
    %p107 = por %p105, %p106
    %p108 = scmp.ne.s32.totalorder %s97, %s98
    %p109 = scmp.eq.s32.totalorder %s14, 0
    %p110 = por %p108, %p109
    %p111 = scmp.ne.s32.totalorder %s97, %s98
    %p112 = scmp.eq.s32.totalorder %s15, 7
    %p113 = por %p111, %p112
    %p115 = scmp.ne.s32.totalorder %s98, %s114
    %p116 = scmp.eq.s32.totalorder %s15, 0
    %p117 = por %p115, %p116
    %s118 = ssub.s32 %s16, %s35
    %s119 = ssub.s32 %s17, %s31
    %s120 = sor.u32 %s118, %s119
    %p121 = scmp.eq.s32.totalorder %s120, 0
    %s123 = sadd.s32 %s122, 1
    %s124 = scalar_select %p121, %s122, %s123
    %p127 = pneg %p121
    %p128 = scmp.eq.s32.totalorder %s9, 7
    %p129 = por %p127, %p128
    %p130 = scmp.ne.s32.totalorder %s122, %s125
    %p131 = scmp.eq.s32.totalorder %s9, 0
    %p132 = por %p130, %p131
    %p133 = scmp.ne.s32.totalorder %s122, %s125
    %p134 = scmp.eq.s32.totalorder %s14, 7
    %p135 = por %p133, %p134
    %p136 = scmp.ne.s32.totalorder %s125, %s126
    %p137 = scmp.eq.s32.totalorder %s14, 0
    %p138 = por %p136, %p137
    %p139 = scmp.ne.s32.totalorder %s125, %s126
    %p140 = scmp.eq.s32.totalorder %s15, 7
    %p141 = por %p139, %p140
    %p143 = scmp.ne.s32.totalorder %s126, %s142
    %p144 = scmp.eq.s32.totalorder %s15, 0
    %p145 = por %p143, %p144
    %p146 = scmp.le.s32.totalorder 1, %s9
    %p147 = scmp.lt.s32.totalorder %s9, 9
    %p148 = pnand %p146, %p147
    %p149 = pneg %p148
    // Predicated region
    $region9: #{tpu_custom_call.1} parent=5 // pred_check
      _
    $region10: #{tpu_custom_call.1} parent=5 // pred_check_branch
      %151 = sbr.rel (%p148) target = $region12
    $region11: #{tpu_custom_call.1} parent=5 // pred_region
      %s152 = ssub.s32 %s9, 1
      // Predicated region
      $region13: #{tpu_custom_call.1} parent=11 // pred_check
        %p153 = pneg %p84
      $region14: #{tpu_custom_call.1} parent=11 // pred_check_branch
        %155 = sbr.rel (%p153) target = $region16
      $region15: #{tpu_custom_call.1} parent=11 // pred_region
        %s156 = smul.u32 4, %s21
        %p157 = scmp.lt.s32.totalorder %s156, 3
        %s158 = scalar_select %p157, %s156, 3
        %p159 = scmp.lt.s32.totalorder %s20, 0
        %s160 = scalar_select %p159, %s20, 0
        %s161 = sadd.s32 %s160, %s158
        %s162 = smul.addr %s161, 4
        %s163 = scalar_lea.vmem %s1, %s162
        %s164 = smul.u32 4, %s21
      $region16: #{tpu_custom_call.1} parent=11 // pred_fallthru
        _
      // Predicated region
      $region17: #{tpu_custom_call.1} parent=11 // pred_check
        %p165 = pneg %p110
      $region18: #{tpu_custom_call.1} parent=11 // pred_check_branch
        %167 = sbr.rel (%p165) target = $region20
      $region19: #{tpu_custom_call.1} parent=11 // pred_region
        %p168 = scmp.lt.s32.totalorder %s20, 0
        %s169 = scalar_select %p168, %s20, 0
        %s170 = scalar_lea.vmem %s2, %s169
      $region20: #{tpu_custom_call.1} parent=11 // pred_fallthru
        _
    $region12: #{tpu_custom_call.1} parent=5 // pred_fallthru
      _
    %p171 = scmp.lt.s32.totalorder %s9, 8
    // Predicated region
    $region21: #{tpu_custom_call.1} parent=5 // pred_check
      %p172 = pneg %p171
    $region22: #{tpu_custom_call.1} parent=5 // pred_check_branch
      %174 = sbr.rel (%p172) target = $region24
    $region23: #{tpu_custom_call.1} parent=5 // pred_region
      // Predicated region
      $region25: #{tpu_custom_call.1} parent=23 // pred_check
        %p175 = pneg %p50
      $region26: #{tpu_custom_call.1} parent=23 // pred_check_branch
        %177 = sbr.rel (%p175) target = $region28
      $region27: #{tpu_custom_call.1} parent=23 // pred_region
        %s178 = smul.u32 32, %s16
        %p179 = scmp.lt.s32.totalorder %s178, 255
        %s180 = scalar_select %p179, %s178, 255
        %p181 = scmp.lt.s32.totalorder %s18, 0
        %s182 = scalar_select %p181, %s18, 0
        %s183 = sadd.s32 %s182, %s180
        %s184 = smul.addr %s183, 4
        %s185 = scalar_lea.vmem %s0, %s184
        %s186 = smul.u32 32, %s16
      $region28: #{tpu_custom_call.1} parent=23 // pred_fallthru
        _
    $region24: #{tpu_custom_call.1} parent=5 // pred_fallthru
      _
    %p187 = scmp.le.s32.totalorder 1, %s9
    %p188 = scmp.lt.s32.totalorder %s9, 9
    %p189 = pnand %p187, %p188
    %p190 = pneg %p189
    // Predicated region
    $region29: #{tpu_custom_call.1} parent=5 // pred_check
      _
    $region30: #{tpu_custom_call.1} parent=5 // pred_check_branch
      %192 = sbr.rel (%p189) target = $region32
    $region31: #{tpu_custom_call.1} parent=5 // pred_region
      %s193 = ssub.s32 %s9, 1
      %s194 = smul.u32 32, %s19
      %p195 = scmp.lt.s32.totalorder %s194, 255
      %s196 = scalar_select %p195, %s194, 255
      %p197 = scmp.lt.s32.totalorder %s21, 0
      %s198 = scalar_select %p197, %s21, 0
      %s199 = sadd.s32 %s198, %s196
      %s200 = smul.addr %s199, 4
      %s201 = scalar_lea.vmem %s0, %s200
      %p202 = pneg %p56
      %p203 = pneg %p53
      %s204 = smul.u32 4, %s21
      %p205 = scmp.lt.s32.totalorder %s204, 3
      %s206 = scalar_select %p205, %s204, 3
      %p207 = scmp.lt.s32.totalorder %s20, 0
      %s208 = scalar_select %p207, %s20, 0
      %s209 = sadd.s32 %s208, %s206
      %s210 = smul.addr %s209, 4
      %s211 = scalar_lea.vmem %s1, %s210
      %p212 = pneg %p84
      %p213 = pneg %p81
      %p214 = scmp.lt.s32.totalorder %s20, 0
      %s215 = scalar_select %p214, %s20, 0
      %s216 = scalar_lea.vmem %s2, %s215
      %p217 = pneg %p110
      %p218 = pneg %p107
      %p219 = pneg %p138
      %p220 = pneg %p135
      %s221 = smul.u32 32, %s19
      %p222 = scmp.lt.s32.totalorder %s221, 255
      %s223 = scalar_select %p222, %s221, 255
      %p224 = scmp.lt.s32.totalorder %s20, 0
      %s225 = scalar_select %p224, %s20, 0
      %s226 = sadd.s32 %s225, %s223
      %s227 = smul.addr %s226, 4
      %s228 = scalar_lea.vmem %s3, %s227
      %s229 = smul.u32 32, %s19
      %p230 = scmp.lt.s32.totalorder %s229, 255
      %s231 = scalar_select %p230, %s229, 255
      %p232 = scmp.lt.s32.totalorder %s21, 0
      %s233 = scalar_select %p232, %s21, 0
      %s234 = sadd.s32 %s233, %s231
      %s235 = smul.addr %s234, 4
      %s236 = scalar_lea.vmem %s0, %s235
      %s237 = smul.u32 32, %s19
      %s238 = smul.u32 4, %s21
      %p239 = scmp.lt.s32.totalorder %s238, 3
      %s240 = scalar_select %p239, %s238, 3
      %p241 = scmp.lt.s32.totalorder %s20, 0
      %s242 = scalar_select %p241, %s20, 0
      %s243 = sadd.s32 %s242, %s240
      %s244 = smul.addr %s243, 4
      %s245 = scalar_lea.vmem %s1, %s244
      %s246 = smul.u32 4, %s21
      %p247 = scmp.lt.s32.totalorder %s20, 0
      %s248 = scalar_select %p247, %s20, 0
      %s249 = scalar_lea.vmem %s2, %s248
      %s250 = smul.u32 32, %s19
      %p251 = scmp.lt.s32.totalorder %s250, 255
      %s252 = scalar_select %p251, %s250, 255
      %p253 = scmp.lt.s32.totalorder %s20, 0
      %s254 = scalar_select %p253, %s20, 0
      %s255 = sadd.s32 %s254, %s252
      %s256 = smul.addr %s255, 4
      %s257 = scalar_lea.vmem %s3, %s256
      %s258 = smul.u32 32, %s19
      %p260 = scmp.eq.s32.totalorder %s21, 0
      // Predicated region
      $region33: #{tpu_custom_call.1} parent=31 // pred_check
        %p261 = pneg %p260
      $region34: #{tpu_custom_call.1} parent=31 // pred_check_branch
        %263 = sbr.rel (%p261) target = $region36
      $region35: #{tpu_custom_call.1} parent=31 // pred_region
        %vm264 = vcmask 523264
        %265 = vst.msk [vmem:[#allocation2] sm:$0xff] %vm264, 0.0
        %266 = vst.msk [vmem:[#allocation2 + $0x8] sm:$0xff] %vm264, 0.0
        %267 = vst.msk [vmem:[#allocation2 + $0x10] sm:$0xff] %vm264, 0.0
        %268 = vst.msk [vmem:[#allocation2 + $0x18] sm:$0xff] %vm264, 0.0
        %269 = vst.msk [vmem:[#allocation2 + $0x20] sm:$0xff] %vm264, 0.0
        %270 = vst.msk [vmem:[#allocation2 + $0x28] sm:$0xff] %vm264, 0.0
        %271 = vst.msk [vmem:[#allocation2 + $0x30] sm:$0xff] %vm264, 0.0
        %272 = vst.msk [vmem:[#allocation2 + $0x38] sm:$0xff] %vm264, 0.0
        %273 = vst.msk [vmem:[#allocation2 + $0x40] sm:$0xff] %vm264, 0.0
        %274 = vst.msk [vmem:[#allocation2 + $0x48] sm:$0xff] %vm264, 0.0
        %275 = vst.msk [vmem:[#allocation2 + $0x50] sm:$0xff] %vm264, 0.0
        %276 = vst.msk [vmem:[#allocation2 + $0x58] sm:$0xff] %vm264, 0.0
        %277 = vst.msk [vmem:[#allocation2 + $0x60] sm:$0xff] %vm264, 0.0
        %278 = vst.msk [vmem:[#allocation2 + $0x68] sm:$0xff] %vm264, 0.0
        %279 = vst.msk [vmem:[#allocation2 + $0x70] sm:$0xff] %vm264, 0.0
        %280 = vst.msk [vmem:[#allocation2 + $0x78] sm:$0xff] %vm264, 0.0
        %281 = vst.msk [vmem:[#allocation2 + $0x80] sm:$0xff] %vm264, 0.0
        %282 = vst.msk [vmem:[#allocation2 + $0x88] sm:$0xff] %vm264, 0.0
        %283 = vst.msk [vmem:[#allocation2 + $0x90] sm:$0xff] %vm264, 0.0
        %284 = vst.msk [vmem:[#allocation2 + $0x98] sm:$0xff] %vm264, 0.0
        %285 = vst.msk [vmem:[#allocation2 + $0xa0] sm:$0xff] %vm264, 0.0
        %286 = vst.msk [vmem:[#allocation2 + $0xa8] sm:$0xff] %vm264, 0.0
        %287 = vst.msk [vmem:[#allocation2 + $0xb0] sm:$0xff] %vm264, 0.0
        %288 = vst.msk [vmem:[#allocation2 + $0xb8] sm:$0xff] %vm264, 0.0
        %289 = vst.msk [vmem:[#allocation2 + $0xc0] sm:$0xff] %vm264, 0.0
        %290 = vst.msk [vmem:[#allocation2 + $0xc8] sm:$0xff] %vm264, 0.0
        %291 = vst.msk [vmem:[#allocation2 + $0xd0] sm:$0xff] %vm264, 0.0
        %292 = vst.msk [vmem:[#allocation2 + $0xd8] sm:$0xff] %vm264, 0.0
        %293 = vst.msk [vmem:[#allocation2 + $0xe0] sm:$0xff] %vm264, 0.0
        %294 = vst.msk [vmem:[#allocation2 + $0xe8] sm:$0xff] %vm264, 0.0
        %295 = vst.msk [vmem:[#allocation2 + $0xf0] sm:$0xff] %vm264, 0.0
        %296 = vst.msk [vmem:[#allocation2 + $0xf8] sm:$0xff] %vm264, 0.0
      $region36: #{tpu_custom_call.1} parent=31 // pred_fallthru
        _
      %v297 = vld [vmem:[#allocation2] sm:$0xff]
      %v298 = vld [vmem:[#allocation2 + $0x8] sm:$0xff]
      %v299 = vld [vmem:[#allocation2 + $0x10] sm:$0xff]
      %v300 = vld [vmem:[#allocation2 + $0x18] sm:$0xff]
      %v301 = vld [vmem:[#allocation2 + $0x20] sm:$0xff]
      %v302 = vld [vmem:[#allocation2 + $0x28] sm:$0xff]
      %v303 = vld [vmem:[#allocation2 + $0x30] sm:$0xff]
      %v304 = vld [vmem:[#allocation2 + $0x38] sm:$0xff]
      %v305 = vld [vmem:[#allocation2 + $0x40] sm:$0xff]
      %v306 = vld [vmem:[#allocation2 + $0x48] sm:$0xff]
      %v307 = vld [vmem:[#allocation2 + $0x50] sm:$0xff]
      %v308 = vld [vmem:[#allocation2 + $0x58] sm:$0xff]
      %v309 = vld [vmem:[#allocation2 + $0x60] sm:$0xff]
      %v310 = vld [vmem:[#allocation2 + $0x68] sm:$0xff]
      %v311 = vld [vmem:[#allocation2 + $0x70] sm:$0xff]
      %v312 = vld [vmem:[#allocation2 + $0x78] sm:$0xff]
      %v313 = vld [vmem:[#allocation2 + $0x80] sm:$0xff]
      %v314 = vld [vmem:[#allocation2 + $0x88] sm:$0xff]
      %v315 = vld [vmem:[#allocation2 + $0x90] sm:$0xff]
      %v316 = vld [vmem:[#allocation2 + $0x98] sm:$0xff]
      %v317 = vld [vmem:[#allocation2 + $0xa0] sm:$0xff]
      %v318 = vld [vmem:[#allocation2 + $0xa8] sm:$0xff]
      %v319 = vld [vmem:[#allocation2 + $0xb0] sm:$0xff]
      %v320 = vld [vmem:[#allocation2 + $0xb8] sm:$0xff]
      %v321 = vld [vmem:[#allocation2 + $0xc0] sm:$0xff]
      %v322 = vld [vmem:[#allocation2 + $0xc8] sm:$0xff]
      %v323 = vld [vmem:[#allocation2 + $0xd0] sm:$0xff]
      %v324 = vld [vmem:[#allocation2 + $0xd8] sm:$0xff]
      %v325 = vld [vmem:[#allocation2 + $0xe0] sm:$0xff]
      %v326 = vld [vmem:[#allocation2 + $0xe8] sm:$0xff]
      %v327 = vld [vmem:[#allocation2 + $0xf0] sm:$0xff]
      %v328 = vld [vmem:[#allocation2 + $0xf8] sm:$0xff]
      %v329 = vld [vmem:[%s236] sm:$0xf]
      %v330 = vld [vmem:[%s236 + $0x4] sm:$0xf]
      %v331 = vld [vmem:[%s236 + $0x8] sm:$0xf]
      %v332 = vld [vmem:[%s236 + $0xc] sm:$0xf]
      %v333 = vld [vmem:[%s236 + $0x10] sm:$0xf]
      %v334 = vld [vmem:[%s236 + $0x14] sm:$0xf]
      %v335 = vld [vmem:[%s236 + $0x18] sm:$0xf]
      %v336 = vld [vmem:[%s236 + $0x1c] sm:$0xf]
      %v337 = vld [vmem:[%s236 + $0x20] sm:$0xf]
      %v338 = vld [vmem:[%s236 + $0x24] sm:$0xf]
      %v339 = vld [vmem:[%s236 + $0x28] sm:$0xf]
      %v340 = vld [vmem:[%s236 + $0x2c] sm:$0xf]
      %v341 = vld [vmem:[%s236 + $0x30] sm:$0xf]
      %v342 = vld [vmem:[%s236 + $0x34] sm:$0xf]
      %v343 = vld [vmem:[%s236 + $0x38] sm:$0xf]
      %v344 = vld [vmem:[%s236 + $0x3c] sm:$0xf]
      %v345 = vld [vmem:[%s236 + $0x40] sm:$0xf]
      %v346 = vld [vmem:[%s236 + $0x44] sm:$0xf]
      %v347 = vld [vmem:[%s236 + $0x48] sm:$0xf]
      %v348 = vld [vmem:[%s236 + $0x4c] sm:$0xf]
      %v349 = vld [vmem:[%s236 + $0x50] sm:$0xf]
      %v350 = vld [vmem:[%s236 + $0x54] sm:$0xf]
      %v351 = vld [vmem:[%s236 + $0x58] sm:$0xf]
      %v352 = vld [vmem:[%s236 + $0x5c] sm:$0xf]
      %v353 = vld [vmem:[%s236 + $0x60] sm:$0xf]
      %v354 = vld [vmem:[%s236 + $0x64] sm:$0xf]
      %v355 = vld [vmem:[%s236 + $0x68] sm:$0xf]
      %v356 = vld [vmem:[%s236 + $0x6c] sm:$0xf]
      %v357 = vld [vmem:[%s236 + $0x70] sm:$0xf]
      %v358 = vld [vmem:[%s236 + $0x74] sm:$0xf]
      %v359 = vld [vmem:[%s236 + $0x78] sm:$0xf]
      %v360 = vld [vmem:[%s236 + $0x7c] sm:$0xf]
      %v361 = vld [vmem:[%s245] sm:$0xf]
      %v362 = vld [vmem:[%s245 + $0x4] sm:$0xf]
      %v363 = vld [vmem:[%s245 + $0x8] sm:$0xf]
      %v364 = vld [vmem:[%s245 + $0xc] sm:$0x3]
      %v397 = vunpack.c.l.b16 %v329
      %v398 = vunpack.c.l.b16 %v330
      %v399 = vunpack.c.l.b16 %v331
      %v400 = vunpack.c.l.b16 %v332
      %v401 = vunpack.c.l.b16 %v333
      %v402 = vunpack.c.l.b16 %v334
      %v403 = vunpack.c.l.b16 %v335
      %v404 = vunpack.c.l.b16 %v336
      %v405 = vunpack.c.l.b16 %v337
      %v406 = vunpack.c.l.b16 %v338
      %v407 = vunpack.c.l.b16 %v339
      %v408 = vunpack.c.l.b16 %v340
      %v409 = vunpack.c.l.b16 %v341
      %v410 = vunpack.c.l.b16 %v342
      %v411 = vunpack.c.l.b16 %v343
      %v412 = vunpack.c.l.b16 %v344
      %v413 = vunpack.c.l.b16 %v345
      %v414 = vunpack.c.l.b16 %v346
      %v415 = vunpack.c.l.b16 %v347
      %v416 = vunpack.c.l.b16 %v348
      %v417 = vunpack.c.l.b16 %v349
      %v418 = vunpack.c.l.b16 %v350
      %v419 = vunpack.c.l.b16 %v351
      %v420 = vunpack.c.l.b16 %v352
      %v421 = vunpack.c.l.b16 %v353
      %v422 = vunpack.c.l.b16 %v354
      %v423 = vunpack.c.l.b16 %v355
      %v424 = vunpack.c.l.b16 %v356
      %v425 = vunpack.c.l.b16 %v357
      %v426 = vunpack.c.l.b16 %v358
      %v427 = vunpack.c.l.b16 %v359
      %v428 = vunpack.c.l.b16 %v360
      %v429 = vpack.c.b16 %v398, %v397
      %v430 = vpack.c.b16 %v400, %v399
      %v431 = vpack.c.b16 %v402, %v401
      %v432 = vpack.c.b16 %v404, %v403
      %v433 = vpack.c.b16 %v406, %v405
      %v434 = vpack.c.b16 %v408, %v407
      %v435 = vpack.c.b16 %v410, %v409
      %v436 = vpack.c.b16 %v412, %v411
      %v437 = vpack.c.b16 %v414, %v413
      %v438 = vpack.c.b16 %v416, %v415
      %v439 = vpack.c.b16 %v418, %v417
      %v440 = vpack.c.b16 %v420, %v419
      %v441 = vpack.c.b16 %v422, %v421
      %v442 = vpack.c.b16 %v424, %v423
      %v443 = vpack.c.b16 %v426, %v425
      %v444 = vpack.c.b16 %v428, %v427
      %v449 = vunpack.c.l.b16 %v361
      %v450 = vunpack.c.l.b16 %v362
      %v451 = vunpack.c.l.b16 %v363
      %v452 = vunpack.c.l.b16 %v364
      %v453 = vpack.c.b16 %v450, %v449
      %v454 = vpack.c.b16 %v452, %v451
      %vm456 = vcmask 220160
      %v458 = vsel %vm456, %v429, 0
      %v461 = vsel %vm456, %v430, 0
      %v464 = vsel %vm456, %v431, 0
      %v467 = vsel %vm456, %v432, 0
      %v470 = vsel %vm456, %v433, 0
      %v473 = vsel %vm456, %v434, 0
      %v476 = vsel %vm456, %v435, 0
      %v479 = vsel %vm456, %v436, 0
      %v482 = vsel %vm456, %v437, 0
      %v485 = vsel %vm456, %v438, 0
      %v488 = vsel %vm456, %v439, 0
      %v491 = vsel %vm456, %v440, 0
      %v494 = vsel %vm456, %v441, 0
      %v497 = vsel %vm456, %v442, 0
      %v500 = vsel %vm456, %v443, 0
      %v503 = vsel %vm456, %v444, 0
      %vm505 = vcmask 1044480
      %vm506 = vcmask 1045504
      %v507 = vsel %vm505, 4294967295, 65535
      %v508 = vsel %vm506, %v507, 0
      %v510 = vand.u32 %v454, %v508
      %512 = vmatprep.subr.bf16.mxu0 0
      %513 = vmatpush1.bf16.msra.mxu0 %v453
      %514 = vmatprep.subr.bf16.mxu0 0
      %515 = vmatpush1.bf16.msra.mxu0 %v510
      %516 = vmatprep.subr.bf16.mxu0 0
      %517 = vmatpush1.bf16.msra.mxu0 0
      %518 = vmatprep.subr.bf16.mxu0 0
      %519 = vmatpush1.bf16.msra.mxu0 0
      %520 = vmatprep.subr.bf16.mxu0 0
      %521 = vmatpush1.bf16.msra.mxu0 0
      %522 = vmatprep.subr.bf16.mxu0 0
      %523 = vmatpush1.bf16.msra.mxu0 0
      %524 = vmatprep.subr.bf16.mxu0 0
      %525 = vmatpush1.bf16.msra.mxu0 0
      %526 = vmatprep.subr.bf16.mxu0 0
      %527 = vmatpush1.bf16.msra.mxu0 0
      %528 = vmatprep.subr.bf16.mxu0 0
      %529 = vmatpush1.bf16.msra.mxu0 0
      %530 = vmatprep.subr.bf16.mxu0 0
      %531 = vmatpush1.bf16.msra.mxu0 0
      %532 = vmatprep.subr.bf16.mxu0 0
      %533 = vmatpush1.bf16.msra.mxu0 0
      %534 = vmatprep.subr.bf16.mxu0 0
      %535 = vmatpush1.bf16.msra.mxu0 0
      %536 = vmatprep.subr.bf16.mxu0 0
      %537 = vmatpush1.bf16.msra.mxu0 0
      %538 = vmatprep.subr.bf16.mxu0 0
      %539 = vmatpush1.bf16.msra.mxu0 0
      %540 = vmatprep.subr.bf16.mxu0 0
      %541 = vmatpush1.bf16.msra.mxu0 0
      %542 = vmatprep.subr.bf16.mxu0 0
      %543 = vmatpush1.bf16.msra.mxu0 0
      %544 = vmatprep.mubr.bf16.mxu0 0
      %545 = vmatmul.mubr.bf16.gmra.mrb[0].mxu0 %v458
      %v546 = vpop.f32.mrb[0].mxu0
      %v547 = vadd.f32 0.0, %v546
      %v548 = vpop.f32.mrb[0].mxu0
      %v549 = vpop.f32.mrb[0].mxu0
      %v550 = vadd.f32 0.0, %v549
      %v551 = vpop.f32.mrb[0].mxu0
      %552 = vmatprep.mubr.bf16.mxu0 0
      %553 = vmatmul.mubr.bf16.gmra.mrb[0].mxu0 %v461
      %v554 = vpop.f32.mrb[0].mxu0
      %v555 = vadd.f32 0.0, %v554
      %v556 = vpop.f32.mrb[0].mxu0
      %v557 = vpop.f32.mrb[0].mxu0
      %v558 = vadd.f32 0.0, %v557
      %v559 = vpop.f32.mrb[0].mxu0
      %560 = vmatprep.mubr.bf16.mxu0 0
      %561 = vmatmul.mubr.bf16.gmra.mrb[0].mxu0 %v464
      %v562 = vpop.f32.mrb[0].mxu0
      %v563 = vadd.f32 0.0, %v562
      %v564 = vpop.f32.mrb[0].mxu0
      %v565 = vpop.f32.mrb[0].mxu0
      %v566 = vadd.f32 0.0, %v565
      %v567 = vpop.f32.mrb[0].mxu0
      %568 = vmatprep.mubr.bf16.mxu0 0
      %569 = vmatmul.mubr.bf16.gmra.mrb[0].mxu0 %v467
      %v570 = vpop.f32.mrb[0].mxu0
      %v571 = vadd.f32 0.0, %v570
      %v572 = vpop.f32.mrb[0].mxu0
      %v573 = vpop.f32.mrb[0].mxu0
      %v574 = vadd.f32 0.0, %v573
      %v575 = vpop.f32.mrb[0].mxu0
      %576 = vmatprep.mubr.bf16.mxu0 0
      %577 = vmatmul.mubr.bf16.gmra.mrb[0].mxu0 %v470
      %v578 = vpop.f32.mrb[0].mxu0
      %v579 = vadd.f32 0.0, %v578
      %v580 = vpop.f32.mrb[0].mxu0
      %v581 = vpop.f32.mrb[0].mxu0
      %v582 = vadd.f32 0.0, %v581
      %v583 = vpop.f32.mrb[0].mxu0
      %584 = vmatprep.mubr.bf16.mxu0 0
      %585 = vmatmul.mubr.bf16.gmra.mrb[0].mxu0 %v473
      %v586 = vpop.f32.mrb[0].mxu0
      %v587 = vadd.f32 0.0, %v586
      %v588 = vpop.f32.mrb[0].mxu0
      %v589 = vpop.f32.mrb[0].mxu0
      %v590 = vadd.f32 0.0, %v589
      %v591 = vpop.f32.mrb[0].mxu0
      %592 = vmatprep.mubr.bf16.mxu0 0
      %593 = vmatmul.mubr.bf16.gmra.mrb[0].mxu0 %v476
      %v594 = vpop.f32.mrb[0].mxu0
      %v595 = vadd.f32 0.0, %v594
      %v596 = vpop.f32.mrb[0].mxu0
      %v597 = vpop.f32.mrb[0].mxu0
      %v598 = vadd.f32 0.0, %v597
      %v599 = vpop.f32.mrb[0].mxu0
      %600 = vmatprep.mubr.bf16.mxu0 0
      %601 = vmatmul.mubr.bf16.gmra.mrb[0].mxu0 %v479
      %v602 = vpop.f32.mrb[0].mxu0
      %v603 = vadd.f32 0.0, %v602
      %v604 = vpop.f32.mrb[0].mxu0
      %v605 = vpop.f32.mrb[0].mxu0
      %v606 = vadd.f32 0.0, %v605
      %v607 = vpop.f32.mrb[0].mxu0
      %608 = vmatprep.mubr.bf16.mxu0 0
      %609 = vmatmul.mubr.bf16.gmra.mrb[0].mxu0 %v482
      %v610 = vpop.f32.mrb[0].mxu0
      %v611 = vadd.f32 0.0, %v610
      %v612 = vpop.f32.mrb[0].mxu0
      %v613 = vpop.f32.mrb[0].mxu0
      %v614 = vadd.f32 0.0, %v613
      %v615 = vpop.f32.mrb[0].mxu0
      %616 = vmatprep.mubr.bf16.mxu0 0
      %617 = vmatmul.mubr.bf16.gmra.mrb[0].mxu0 %v485
      %v618 = vpop.f32.mrb[0].mxu0
      %v619 = vadd.f32 0.0, %v618
      %v620 = vpop.f32.mrb[0].mxu0
      %v621 = vpop.f32.mrb[0].mxu0
      %v622 = vadd.f32 0.0, %v621
      %v623 = vpop.f32.mrb[0].mxu0
      %624 = vmatprep.mubr.bf16.mxu0 0
      %625 = vmatmul.mubr.bf16.gmra.mrb[0].mxu0 %v488
      %v626 = vpop.f32.mrb[0].mxu0
      %v627 = vadd.f32 0.0, %v626
      %v628 = vpop.f32.mrb[0].mxu0
      %v629 = vpop.f32.mrb[0].mxu0
      %v630 = vadd.f32 0.0, %v629
      %v631 = vpop.f32.mrb[0].mxu0
      %632 = vmatprep.mubr.bf16.mxu0 0
      %633 = vmatmul.mubr.bf16.gmra.mrb[0].mxu0 %v491
      %v634 = vpop.f32.mrb[0].mxu0
      %v635 = vadd.f32 0.0, %v634
      %v636 = vpop.f32.mrb[0].mxu0
      %v637 = vpop.f32.mrb[0].mxu0
      %v638 = vadd.f32 0.0, %v637
      %v639 = vpop.f32.mrb[0].mxu0
      %640 = vmatprep.mubr.bf16.mxu0 0
      %641 = vmatmul.mubr.bf16.gmra.mrb[0].mxu0 %v494
      %v642 = vpop.f32.mrb[0].mxu0
      %v643 = vadd.f32 0.0, %v642
      %v644 = vpop.f32.mrb[0].mxu0
      %v645 = vpop.f32.mrb[0].mxu0
      %v646 = vadd.f32 0.0, %v645
      %v647 = vpop.f32.mrb[0].mxu0
      %648 = vmatprep.mubr.bf16.mxu0 0
      %649 = vmatmul.mubr.bf16.gmra.mrb[0].mxu0 %v497
      %v650 = vpop.f32.mrb[0].mxu0
      %v651 = vadd.f32 0.0, %v650
      %v652 = vpop.f32.mrb[0].mxu0
      %v653 = vpop.f32.mrb[0].mxu0
      %v654 = vadd.f32 0.0, %v653
      %v655 = vpop.f32.mrb[0].mxu0
      %656 = vmatprep.mubr.bf16.mxu0 0
      %657 = vmatmul.mubr.bf16.gmra.mrb[0].mxu0 %v500
      %v658 = vpop.f32.mrb[0].mxu0
      %v659 = vadd.f32 0.0, %v658
      %v660 = vpop.f32.mrb[0].mxu0
      %v661 = vpop.f32.mrb[0].mxu0
      %v662 = vadd.f32 0.0, %v661
      %v663 = vpop.f32.mrb[0].mxu0
      %664 = vmatprep.mubr.bf16.mxu0 0
      %665 = vmatmul.mubr.bf16.gmra.mrb[0].mxu0 %v503
      %v666 = vpop.f32.mrb[0].mxu0
      %v667 = vadd.f32 0.0, %v666
      %v668 = vpop.f32.mrb[0].mxu0
      %v669 = vpop.f32.mrb[0].mxu0
      %v670 = vadd.f32 0.0, %v669
      %v671 = vpop.f32.mrb[0].mxu0
      %672 = vdwg.mxu0
      %v673 = vadd.f32 %v297, %v547
      %v674 = vadd.f32 %v298, %v550
      %v675 = vadd.f32 %v299, %v555
      %v676 = vadd.f32 %v300, %v558
      %v677 = vadd.f32 %v301, %v563
      %v678 = vadd.f32 %v302, %v566
      %v679 = vadd.f32 %v303, %v571
      %v680 = vadd.f32 %v304, %v574
      %v681 = vadd.f32 %v305, %v579
      %v682 = vadd.f32 %v306, %v582
      %v683 = vadd.f32 %v307, %v587
      %v684 = vadd.f32 %v308, %v590
      %v685 = vadd.f32 %v309, %v595
      %v686 = vadd.f32 %v310, %v598
      %v687 = vadd.f32 %v311, %v603
      %v688 = vadd.f32 %v312, %v606
      %v689 = vadd.f32 %v313, %v611
      %v690 = vadd.f32 %v314, %v614
      %v691 = vadd.f32 %v315, %v619
      %v692 = vadd.f32 %v316, %v622
      %v693 = vadd.f32 %v317, %v627
      %v694 = vadd.f32 %v318, %v630
      %v695 = vadd.f32 %v319, %v635
      %v696 = vadd.f32 %v320, %v638
      %v697 = vadd.f32 %v321, %v643
      %v698 = vadd.f32 %v322, %v646
      %v699 = vadd.f32 %v323, %v651
      %v700 = vadd.f32 %v324, %v654
      %v701 = vadd.f32 %v325, %v659
      %v702 = vadd.f32 %v326, %v662
      %v703 = vadd.f32 %v327, %v667
      %v704 = vadd.f32 %v328, %v670
      %vm705 = vcmask 523264
      %706 = vst.msk [vmem:[#allocation2] sm:$0xff] %vm705, %v673
      %707 = vst.msk [vmem:[#allocation2 + $0x8] sm:$0xff] %vm705, %v674
      %708 = vst.msk [vmem:[#allocation2 + $0x10] sm:$0xff] %vm705, %v675
      %709 = vst.msk [vmem:[#allocation2 + $0x18] sm:$0xff] %vm705, %v676
      %710 = vst.msk [vmem:[#allocation2 + $0x20] sm:$0xff] %vm705, %v677
      %711 = vst.msk [vmem:[#allocation2 + $0x28] sm:$0xff] %vm705, %v678
      %712 = vst.msk [vmem:[#allocation2 + $0x30] sm:$0xff] %vm705, %v679
      %713 = vst.msk [vmem:[#allocation2 + $0x38] sm:$0xff] %vm705, %v680
      %714 = vst.msk [vmem:[#allocation2 + $0x40] sm:$0xff] %vm705, %v681
      %715 = vst.msk [vmem:[#allocation2 + $0x48] sm:$0xff] %vm705, %v682
      %716 = vst.msk [vmem:[#allocation2 + $0x50] sm:$0xff] %vm705, %v683
      %717 = vst.msk [vmem:[#allocation2 + $0x58] sm:$0xff] %vm705, %v684
      %718 = vst.msk [vmem:[#allocation2 + $0x60] sm:$0xff] %vm705, %v685
      %719 = vst.msk [vmem:[#allocation2 + $0x68] sm:$0xff] %vm705, %v686
      %720 = vst.msk [vmem:[#allocation2 + $0x70] sm:$0xff] %vm705, %v687
      %721 = vst.msk [vmem:[#allocation2 + $0x78] sm:$0xff] %vm705, %v688
      %722 = vst.msk [vmem:[#allocation2 + $0x80] sm:$0xff] %vm705, %v689
      %723 = vst.msk [vmem:[#allocation2 + $0x88] sm:$0xff] %vm705, %v690
      %724 = vst.msk [vmem:[#allocation2 + $0x90] sm:$0xff] %vm705, %v691
      %725 = vst.msk [vmem:[#allocation2 + $0x98] sm:$0xff] %vm705, %v692
      %726 = vst.msk [vmem:[#allocation2 + $0xa0] sm:$0xff] %vm705, %v693
      %727 = vst.msk [vmem:[#allocation2 + $0xa8] sm:$0xff] %vm705, %v694
      %728 = vst.msk [vmem:[#allocation2 + $0xb0] sm:$0xff] %vm705, %v695
      %729 = vst.msk [vmem:[#allocation2 + $0xb8] sm:$0xff] %vm705, %v696
      %730 = vst.msk [vmem:[#allocation2 + $0xc0] sm:$0xff] %vm705, %v697
      %731 = vst.msk [vmem:[#allocation2 + $0xc8] sm:$0xff] %vm705, %v698
      %732 = vst.msk [vmem:[#allocation2 + $0xd0] sm:$0xff] %vm705, %v699
      %733 = vst.msk [vmem:[#allocation2 + $0xd8] sm:$0xff] %vm705, %v700
      %734 = vst.msk [vmem:[#allocation2 + $0xe0] sm:$0xff] %vm705, %v701
      %735 = vst.msk [vmem:[#allocation2 + $0xe8] sm:$0xff] %vm705, %v702
      %736 = vst.msk [vmem:[#allocation2 + $0xf0] sm:$0xff] %vm705, %v703
      %737 = vst.msk [vmem:[#allocation2 + $0xf8] sm:$0xff] %vm705, %v704
      // Predicated region
      $region37: #{tpu_custom_call.1} parent=31 // pred_check
        %p738 = pneg %p260
      $region38: #{tpu_custom_call.1} parent=31 // pred_check_branch
        %740 = sbr.rel (%p738) target = $region40
      $region39: #{tpu_custom_call.1} parent=31 // pred_region
        %v741 = vld [vmem:[#allocation2] sm:$0xff]
        %v742 = vld [vmem:[#allocation2 + $0x8] sm:$0xff]
        %v743 = vld [vmem:[#allocation2 + $0x10] sm:$0xff]
        %v744 = vld [vmem:[#allocation2 + $0x18] sm:$0xff]
        %v745 = vld [vmem:[#allocation2 + $0x20] sm:$0xff]
        %v746 = vld [vmem:[#allocation2 + $0x28] sm:$0xff]
        %v747 = vld [vmem:[#allocation2 + $0x30] sm:$0xff]
        %v748 = vld [vmem:[#allocation2 + $0x38] sm:$0xff]
        %v749 = vld [vmem:[#allocation2 + $0x40] sm:$0xff]
        %v750 = vld [vmem:[#allocation2 + $0x48] sm:$0xff]
        %v751 = vld [vmem:[#allocation2 + $0x50] sm:$0xff]
        %v752 = vld [vmem:[#allocation2 + $0x58] sm:$0xff]
        %v753 = vld [vmem:[#allocation2 + $0x60] sm:$0xff]
        %v754 = vld [vmem:[#allocation2 + $0x68] sm:$0xff]
        %v755 = vld [vmem:[#allocation2 + $0x70] sm:$0xff]
        %v756 = vld [vmem:[#allocation2 + $0x78] sm:$0xff]
        %v757 = vld [vmem:[#allocation2 + $0x80] sm:$0xff]
        %v758 = vld [vmem:[#allocation2 + $0x88] sm:$0xff]
        %v759 = vld [vmem:[#allocation2 + $0x90] sm:$0xff]
        %v760 = vld [vmem:[#allocation2 + $0x98] sm:$0xff]
        %v761 = vld [vmem:[#allocation2 + $0xa0] sm:$0xff]
        %v762 = vld [vmem:[#allocation2 + $0xa8] sm:$0xff]
        %v763 = vld [vmem:[#allocation2 + $0xb0] sm:$0xff]
        %v764 = vld [vmem:[#allocation2 + $0xb8] sm:$0xff]
        %v765 = vld [vmem:[#allocation2 + $0xc0] sm:$0xff]
        %v766 = vld [vmem:[#allocation2 + $0xc8] sm:$0xff]
        %v767 = vld [vmem:[#allocation2 + $0xd0] sm:$0xff]
        %v768 = vld [vmem:[#allocation2 + $0xd8] sm:$0xff]
        %v769 = vld [vmem:[#allocation2 + $0xe0] sm:$0xff]
        %v770 = vld [vmem:[#allocation2 + $0xe8] sm:$0xff]
        %v771 = vld [vmem:[#allocation2 + $0xf0] sm:$0xff]
        %v772 = vld [vmem:[#allocation2 + $0xf8] sm:$0xff]
        %v773 = vld [vmem:[%s249] sm:$0x1]
        %v775 = vlaneseq
        %v776 = vshrl.u32 %v775, 7
        %v777 = vsub.s32 0, %v776
        %v778 = vrot.slane %v773, %v777
        %v780 = vadd.f32 %v741, %v778
        %v781 = vadd.f32 %v742, %v778
        %v782 = vadd.f32 %v743, %v778
        %v783 = vadd.f32 %v744, %v778
        %v784 = vadd.f32 %v745, %v778
        %v785 = vadd.f32 %v746, %v778
        %v786 = vadd.f32 %v747, %v778
        %v787 = vadd.f32 %v748, %v778
        %v788 = vadd.f32 %v749, %v778
        %v789 = vadd.f32 %v750, %v778
        %v790 = vadd.f32 %v751, %v778
        %v791 = vadd.f32 %v752, %v778
        %v792 = vadd.f32 %v753, %v778
        %v793 = vadd.f32 %v754, %v778
        %v794 = vadd.f32 %v755, %v778
        %v795 = vadd.f32 %v756, %v778
        %v796 = vadd.f32 %v757, %v778
        %v797 = vadd.f32 %v758, %v778
        %v798 = vadd.f32 %v759, %v778
        %v799 = vadd.f32 %v760, %v778
        %v800 = vadd.f32 %v761, %v778
        %v801 = vadd.f32 %v762, %v778
        %v802 = vadd.f32 %v763, %v778
        %v803 = vadd.f32 %v764, %v778
        %v804 = vadd.f32 %v765, %v778
        %v805 = vadd.f32 %v766, %v778
        %v806 = vadd.f32 %v767, %v778
        %v807 = vadd.f32 %v768, %v778
        %v808 = vadd.f32 %v769, %v778
        %v809 = vadd.f32 %v770, %v778
        %v810 = vadd.f32 %v771, %v778
        %v811 = vadd.f32 %v772, %v778
        %v812 = vmax.f32 %v780, 0.0
        %v813 = vmax.f32 %v781, 0.0
        %v814 = vmax.f32 %v782, 0.0
        %v815 = vmax.f32 %v783, 0.0
        %v816 = vmax.f32 %v784, 0.0
        %v817 = vmax.f32 %v785, 0.0
        %v818 = vmax.f32 %v786, 0.0
        %v819 = vmax.f32 %v787, 0.0
        %v820 = vmax.f32 %v788, 0.0
        %v821 = vmax.f32 %v789, 0.0
        %v822 = vmax.f32 %v790, 0.0
        %v823 = vmax.f32 %v791, 0.0
        %v824 = vmax.f32 %v792, 0.0
        %v825 = vmax.f32 %v793, 0.0
        %v826 = vmax.f32 %v794, 0.0
        %v827 = vmax.f32 %v795, 0.0
        %v828 = vmax.f32 %v796, 0.0
        %v829 = vmax.f32 %v797, 0.0
        %v830 = vmax.f32 %v798, 0.0
        %v831 = vmax.f32 %v799, 0.0
        %v832 = vmax.f32 %v800, 0.0
        %v833 = vmax.f32 %v801, 0.0
        %v834 = vmax.f32 %v802, 0.0
        %v835 = vmax.f32 %v803, 0.0
        %v836 = vmax.f32 %v804, 0.0
        %v837 = vmax.f32 %v805, 0.0
        %v838 = vmax.f32 %v806, 0.0
        %v839 = vmax.f32 %v807, 0.0
        %v840 = vmax.f32 %v808, 0.0
        %v841 = vmax.f32 %v809, 0.0
        %v842 = vmax.f32 %v810, 0.0
        %v843 = vmax.f32 %v811, 0.0
        %v844 = vpack.c.bf16 %v813, %v812
        %v845 = vpack.c.bf16 %v815, %v814
        %v846 = vpack.c.bf16 %v817, %v816
        %v847 = vpack.c.bf16 %v819, %v818
        %v848 = vpack.c.bf16 %v821, %v820
        %v849 = vpack.c.bf16 %v823, %v822
        %v850 = vpack.c.bf16 %v825, %v824
        %v851 = vpack.c.bf16 %v827, %v826
        %v852 = vpack.c.bf16 %v829, %v828
        %v853 = vpack.c.bf16 %v831, %v830
        %v854 = vpack.c.bf16 %v833, %v832
        %v855 = vpack.c.bf16 %v835, %v834
        %v856 = vpack.c.bf16 %v837, %v836
        %v857 = vpack.c.bf16 %v839, %v838
        %v858 = vpack.c.bf16 %v841, %v840
        %v859 = vpack.c.bf16 %v843, %v842
        %v876 = vunpack.c.l.b16 %v844
        %v877 = vunpack.c.h.b16 %v844
        %v878 = vunpack.c.l.b16 %v845
        %v879 = vunpack.c.h.b16 %v845
        %v880 = vunpack.c.l.b16 %v846
        %v881 = vunpack.c.h.b16 %v846
        %v882 = vunpack.c.l.b16 %v847
        %v883 = vunpack.c.h.b16 %v847
        %v884 = vunpack.c.l.b16 %v848
        %v885 = vunpack.c.h.b16 %v848
        %v886 = vunpack.c.l.b16 %v849
        %v887 = vunpack.c.h.b16 %v849
        %v888 = vunpack.c.l.b16 %v850
        %v889 = vunpack.c.h.b16 %v850
        %v890 = vunpack.c.l.b16 %v851
        %v891 = vunpack.c.h.b16 %v851
        %v892 = vunpack.c.l.b16 %v852
        %v893 = vunpack.c.h.b16 %v852
        %v894 = vunpack.c.l.b16 %v853
        %v895 = vunpack.c.h.b16 %v853
        %v896 = vunpack.c.l.b16 %v854
        %v897 = vunpack.c.h.b16 %v854
        %v898 = vunpack.c.l.b16 %v855
        %v899 = vunpack.c.h.b16 %v855
        %v900 = vunpack.c.l.b16 %v856
        %v901 = vunpack.c.h.b16 %v856
        %v902 = vunpack.c.l.b16 %v857
        %v903 = vunpack.c.h.b16 %v857
        %v904 = vunpack.c.l.b16 %v858
        %v905 = vunpack.c.h.b16 %v858
        %v906 = vunpack.c.l.b16 %v859
        %v907 = vunpack.c.h.b16 %v859
        %v908 = vpack.c.b16 %v876, %v876
        %v909 = vpack.c.b16 %v877, %v877
        %v910 = vpack.c.b16 %v878, %v878
        %v911 = vpack.c.b16 %v879, %v879
        %v912 = vpack.c.b16 %v880, %v880
        %v913 = vpack.c.b16 %v881, %v881
        %v914 = vpack.c.b16 %v882, %v882
        %v915 = vpack.c.b16 %v883, %v883
        %v916 = vpack.c.b16 %v884, %v884
        %v917 = vpack.c.b16 %v885, %v885
        %v918 = vpack.c.b16 %v886, %v886
        %v919 = vpack.c.b16 %v887, %v887
        %v920 = vpack.c.b16 %v888, %v888
        %v921 = vpack.c.b16 %v889, %v889
        %v922 = vpack.c.b16 %v890, %v890
        %v923 = vpack.c.b16 %v891, %v891
        %v924 = vpack.c.b16 %v892, %v892
        %v925 = vpack.c.b16 %v893, %v893
        %v926 = vpack.c.b16 %v894, %v894
        %v927 = vpack.c.b16 %v895, %v895
        %v928 = vpack.c.b16 %v896, %v896
        %v929 = vpack.c.b16 %v897, %v897
        %v930 = vpack.c.b16 %v898, %v898
        %v931 = vpack.c.b16 %v899, %v899
        %v932 = vpack.c.b16 %v900, %v900
        %v933 = vpack.c.b16 %v901, %v901
        %v934 = vpack.c.b16 %v902, %v902
        %v935 = vpack.c.b16 %v903, %v903
        %v936 = vpack.c.b16 %v904, %v904
        %v937 = vpack.c.b16 %v905, %v905
        %v938 = vpack.c.b16 %v906, %v906
        %v939 = vpack.c.b16 %v907, %v907
        %vm972 = vcmask 519168
        %973 = vst.msk [vmem:[%s257] sm:$0xf] %vm972, %v908
        %974 = vst.msk [vmem:[%s257 + $0x4] sm:$0xf] %vm972, %v909
        %975 = vst.msk [vmem:[%s257 + $0x8] sm:$0xf] %vm972, %v910
        %976 = vst.msk [vmem:[%s257 + $0xc] sm:$0xf] %vm972, %v911
        %977 = vst.msk [vmem:[%s257 + $0x10] sm:$0xf] %vm972, %v912
        %978 = vst.msk [vmem:[%s257 + $0x14] sm:$0xf] %vm972, %v913
        %979 = vst.msk [vmem:[%s257 + $0x18] sm:$0xf] %vm972, %v914
        %980 = vst.msk [vmem:[%s257 + $0x1c] sm:$0xf] %vm972, %v915
        %981 = vst.msk [vmem:[%s257 + $0x20] sm:$0xf] %vm972, %v916
        %982 = vst.msk [vmem:[%s257 + $0x24] sm:$0xf] %vm972, %v917
        %983 = vst.msk [vmem:[%s257 + $0x28] sm:$0xf] %vm972, %v918
        %984 = vst.msk [vmem:[%s257 + $0x2c] sm:$0xf] %vm972, %v919
        %985 = vst.msk [vmem:[%s257 + $0x30] sm:$0xf] %vm972, %v920
        %986 = vst.msk [vmem:[%s257 + $0x34] sm:$0xf] %vm972, %v921
        %987 = vst.msk [vmem:[%s257 + $0x38] sm:$0xf] %vm972, %v922
        %988 = vst.msk [vmem:[%s257 + $0x3c] sm:$0xf] %vm972, %v923
        %989 = vst.msk [vmem:[%s257 + $0x40] sm:$0xf] %vm972, %v924
        %990 = vst.msk [vmem:[%s257 + $0x44] sm:$0xf] %vm972, %v925
        %991 = vst.msk [vmem:[%s257 + $0x48] sm:$0xf] %vm972, %v926
        %992 = vst.msk [vmem:[%s257 + $0x4c] sm:$0xf] %vm972, %v927
        %993 = vst.msk [vmem:[%s257 + $0x50] sm:$0xf] %vm972, %v928
        %994 = vst.msk [vmem:[%s257 + $0x54] sm:$0xf] %vm972, %v929
        %995 = vst.msk [vmem:[%s257 + $0x58] sm:$0xf] %vm972, %v930
        %996 = vst.msk [vmem:[%s257 + $0x5c] sm:$0xf] %vm972, %v931
        %997 = vst.msk [vmem:[%s257 + $0x60] sm:$0xf] %vm972, %v932
        %998 = vst.msk [vmem:[%s257 + $0x64] sm:$0xf] %vm972, %v933
        %999 = vst.msk [vmem:[%s257 + $0x68] sm:$0xf] %vm972, %v934
        %1000 = vst.msk [vmem:[%s257 + $0x6c] sm:$0xf] %vm972, %v935
        %1001 = vst.msk [vmem:[%s257 + $0x70] sm:$0xf] %vm972, %v936
        %1002 = vst.msk [vmem:[%s257 + $0x74] sm:$0xf] %vm972, %v937
        %1003 = vst.msk [vmem:[%s257 + $0x78] sm:$0xf] %vm972, %v938
        %1004 = vst.msk [vmem:[%s257 + $0x7c] sm:$0xf] %vm972, %v939
      $region40: #{tpu_custom_call.1} parent=31 // pred_fallthru
        _
      %s1005 = smul.u32 32, %s19
      %p1006 = scmp.lt.s32.totalorder %s1005, 255
      %s1007 = scalar_select %p1006, %s1005, 255
      %p1008 = scmp.lt.s32.totalorder %s20, 0
      %s1009 = scalar_select %p1008, %s20, 0
      %s1010 = sadd.s32 %s1009, %s1007
      %s1011 = smul.addr %s1010, 4
      %s1012 = scalar_lea.vmem %s3, %s1011
      // Predicated region
      $region41: #{tpu_custom_call.1} parent=31 // pred_check
        %p1013 = pneg %p135
      $region42: #{tpu_custom_call.1} parent=31 // pred_check_branch
        %1015 = sbr.rel (%p1013) target = $region44
      $region43: #{tpu_custom_call.1} parent=31 // pred_region
        %s1016 = smul.u32 32, %s19
      $region44: #{tpu_custom_call.1} parent=31 // pred_fallthru
        _
    $region32: #{tpu_custom_call.1} parent=5 // pred_fallthru
      _
    %p1017 = scmp.le.s32.totalorder 2, %s9
    // Predicated region
    $region45: #{tpu_custom_call.1} parent=5 // pred_check
      %p1018 = pneg %p1017
    $region46: #{tpu_custom_call.1} parent=5 // pred_check_branch
      %1020 = sbr.rel (%p1018) target = $region48
    $region47: #{tpu_custom_call.1} parent=5 // pred_region
      %s1021 = ssub.s32 %s9, 2
      // Predicated region
      $region49: #{tpu_custom_call.1} parent=47 // pred_check
        %p1022 = pneg %p141
      $region50: #{tpu_custom_call.1} parent=47 // pred_check_branch
        %1024 = sbr.rel (%p1022) target = $region52
      $region51: #{tpu_custom_call.1} parent=47 // pred_region
        %s1025 = smul.u32 32, %s22
        %p1026 = scmp.lt.s32.totalorder %s1025, 255
        %s1027 = scalar_select %p1026, %s1025, 255
        %p1028 = scmp.lt.s32.totalorder %s23, 0
        %s1029 = scalar_select %p1028, %s23, 0
        %s1030 = sadd.s32 %s1029, %s1027
        %s1031 = smul.addr %s1030, 4
        %s1032 = scalar_lea.vmem %s3, %s1031
      $region52: #{tpu_custom_call.1} parent=47 // pred_fallthru
        _
    $region48: #{tpu_custom_call.1} parent=5 // pred_fallthru
      _
  $region6: #{tpu_custom_call.1} parent=0 // loop_footer
    %s13 = sadd.s32 1, %s9
  $region7: #{tpu_custom_call.1} parent=0 // loop_footer_branch
    %8 = sbr.rel target = $region3
  $region8: #{tpu_custom_call.1} parent=0 // loop_exit
    _

</llo_original>
